<compile_context>
chip_gen: v5e
topology: v5e:2x2
jax: 0.10.0
libtpu: 0.0.40
codegen_flags: <defaults>
</compile_context>

<pallas_src>
import functools

import jax
import jax.numpy as jnp
from jax.experimental import pallas as pl
from jax.experimental.pallas import tpu as pltpu


def _recurrent_block_kernel(xp_ref, b_ref, q_ref, gamma_ref, beta_ref, o_ref, x1p_ref):
    """Fused out = ConvBNReLU(2 * ConvBNReLU(x)).

    xp_ref    : ((H+2)*N, W*C)  bf16  height-padded input, rows=(y_pad, n), lanes=(x, c)
    b_ref     : (3, W*C, W*C)   bf16  banded conv weights, one per row tap dy
    q_ref     : (W*C, W*C)      f32   channel reduce/broadcast: Q[x*C+c, x'*C+c'] = (c==c')/(N*H*W)
    gamma_ref : (1, W*C)        f32   BN weight, tiled over x
    beta_ref  : (1, W*C)        f32   BN bias,   tiled over x
    o_ref     : (H*N, W*C)      f32   output, rows=(y, n), lanes=(x, c)
    x1p_ref   : ((H+2)*N, W*C)  bf16  VMEM scratch: height-padded intermediate x1
    """
    rows_pad, wc = xp_ref.shape
    mrows = o_ref.shape[0]
    npad = (rows_pad - mrows) // 2        # = N (one padded image row per batch element)
    eps = 1e-5

    def conv_bn_relu(src_ref, scale):
        # --- conv: split-K over the 3 row taps; dx taps + channel mix are inside b_ref ---
        y = jnp.dot(src_ref[pl.ds(0, mrows), :], b_ref[0],
                    preferred_element_type=jnp.float32)
        for dy in (1, 2):
            y = y + jnp.dot(src_ref[pl.ds(dy * npad, mrows), :], b_ref[dy],
                            preferred_element_type=jnp.float32)
        # --- training-mode BatchNorm + ReLU, fused (conv bias cancels under BN) ---------
        row_s = jnp.sum(y, axis=0, keepdims=True)                       # (1, W*C)
        row_ss = jnp.sum(y * y, axis=0, keepdims=True)                  # (1, W*C)
        mean_l = jnp.dot(row_s, q_ref[...],
                         preferred_element_type=jnp.float32) * scale    # (1, W*C)
        ey2_l = jnp.dot(row_ss, q_ref[...],
                        preferred_element_type=jnp.float32) * (scale * scale)
        var_l = ey2_l - mean_l * mean_l
        s = gamma_ref[...] * jax.lax.rsqrt(var_l + eps)                  # (1, W*C)
        t = beta_ref[...] - mean_l * s
        return jnp.maximum(y * (scale * s) + t, 0.0)                     # (H*N, W*C) f32

    # Stage 1: x1 = ReLU(BN(Conv(x)))
    x1 = conv_bn_relu(xp_ref, 1.0)

    # Height-pad x1 into the VMEM scratch: zero only the 2*N halo rows, then the interior.
    halo = jnp.zeros((npad, wc), x1p_ref.dtype)
    x1p_ref[pl.ds(0, npad), :] = halo
    x1p_ref[pl.ds(rows_pad - npad, npad), :] = halo
    x1p_ref[pl.ds(npad, mrows), :] = x1.astype(x1p_ref.dtype)

    # Stage 2: out = ReLU(BN(Conv(x1 + x1))); the doubling folds into the BN scale.
    o_ref[...] = conv_bn_relu(x1p_ref, 2.0).astype(o_ref.dtype)
    # TODO(synk): BatchNorm running_mean/running_var buffer updates (module state) are not
    # materialized; they do not affect this forward output.


def _make_banded_weights(w_oihw, width):
    """Fold the 3x3 dx taps + CxC channel mix into three (W*C, W*C) banded matrices.

    B[dy][xin*C+ci, xout*C+co] = w[co, ci, dy, dx] with xin = xout + dx - 1, zero elsewhere
    (width zero-padding is therefore implicit).
    """
    wt = jnp.transpose(w_oihw, (2, 3, 1, 0))          # (ky, kx, ci, co)
    bands = []
    for dy in range(3):
        bd = 0.0
        for dx in range(3):
            bd = bd + jnp.kron(jnp.eye(width, k=1 - dx, dtype=jnp.float32), wt[dy, dx])
        bands.append(bd)
    return jnp.stack(bands, axis=0)                   # (3, W*C, W*C)


@functools.partial(jax.jit, static_argnames=("t",))
def recurrent_block_forward(x_nchw, params, t=2):
    """Forward of Recurrent_block (NCHW in/out like PyTorch). Valid for any t >= 1:
    for this module the t-loop reduces to out = ConvBNReLU(2 * ConvBNReLU(x))."""
    assert t >= 1, "Recurrent_block requires t >= 1"
    n, c, h, w = x_nchw.shape
    wc = w * c

    # (y, n, x, c) layout, padded in height only (width padding is folded into b_bands).
    x_t = jnp.transpose(x_nchw.astype(jnp.float32), (2, 0, 3, 1))        # (H, N, W, C)
    xp = jnp.pad(x_t, ((1, 1), (0, 0), (0, 0), (0, 0)))                  # (H+2, N, W, C)
    xp = xp.reshape((h + 2) * n, wc).astype(jnp.bfloat16)

    b_bands = _make_banded_weights(params["w"], w).astype(jnp.bfloat16)  # (3, W*C, W*C)
    # Channel reduce/broadcast matrix with the 1/(N*H*W) mean factor folded in.
    q = jnp.kron(jnp.ones((w, w), jnp.float32),
                 jnp.eye(c, dtype=jnp.float32)) * (1.0 / (n * h * w))
    gamma_t = jnp.tile(params["gamma"].astype(jnp.float32), w).reshape(1, wc)
    beta_t = jnp.tile(params["beta"].astype(jnp.float32), w).reshape(1, wc)

    out = pl.pallas_call(
        _recurrent_block_kernel,
        out_shape=jax.ShapeDtypeStruct((h * n, wc), jnp.float32),
        grid=(1,),
        in_specs=[
            pl.BlockSpec(((h + 2) * n, wc), lambda i: (0, 0)),
            pl.BlockSpec((3, wc, wc), lambda i: (0, 0, 0)),
            pl.BlockSpec((wc, wc), lambda i: (0, 0)),
            pl.BlockSpec((1, wc), lambda i: (0, 0)),
            pl.BlockSpec((1, wc), lambda i: (0, 0)),
        ],
        out_specs=pl.BlockSpec((h * n, wc), lambda i: (0, 0)),
        scratch_shapes=[pltpu.VMEM(((h + 2) * n, wc), jnp.bfloat16)],
        compiler_params=pltpu.CompilerParams(
            dimension_semantics=("arbitrary",),
            vmem_limit_bytes=32 * 1024 * 1024),
        # TODO(synk): at production R2U-Net sizes, tile the (y, n) rows (grid with
        # "parallel" semantics for v7x megacore / DMA pipelining) and use two-pass
        # batch-stat accumulation; this single-block version targets small shapes
        # that are fully VMEM-resident.
    )(xp, b_bands, q, gamma_t, beta_t)

    out = out.reshape(h, n, w, c)
    return jnp.transpose(out, (1, 3, 0, 2))                              # -> (N, C, H, W)


def init_params(key, out_ch):
    """Deterministic parameter init (shapes from nn.Conv2d / nn.BatchNorm2d)."""
    k1, k2, k3, k4 = jax.random.split(key, 4)
    w = 0.1 * jax.random.normal(k1, (out_ch, out_ch, 3, 3), jnp.float32)   # OIHW
    b = 0.1 * jax.random.normal(k2, (out_ch,), jnp.float32)                # cancelled by BN
    gamma = 1.0 + 0.1 * jax.random.normal(k3, (out_ch,), jnp.float32)
    beta = 0.1 * jax.random.normal(k4, (out_ch,), jnp.float32)
    return {"w": w, "b": b, "gamma": gamma, "beta": beta}


def _reference(x_nchw, params, t=2):
    """Pure-JAX/XLA reference mirroring the PyTorch forward loop exactly."""
    w, b = params["w"], params["b"]
    gamma, beta = params["gamma"], params["beta"]

    def conv_bn_relu(z):
        y = jax.lax.conv_general_dilated(
            z, w, window_strides=(1, 1), padding=((1, 1), (1, 1)),
            dimension_numbers=("NCHW", "OIHW", "NCHW"))
        y = y + b.reshape(1, -1, 1, 1)
        mean = y.mean(axis=(0, 2, 3), keepdims=True)
        var = ((y - mean) ** 2).mean(axis=(0, 2, 3), keepdims=True)
        y = (y - mean) * jax.lax.rsqrt(var + 1e-5)
        y = y * gamma.reshape(1, -1, 1, 1) + beta.reshape(1, -1, 1, 1)
        return jnp.maximum(y, 0.0)

    x = x_nchw.astype(jnp.float32)
    out = None
    for i in range(t):
        if i == 0:
            x = conv_bn_relu(x)
        out = conv_bn_relu(x + x)
    return out


if __name__ == "__main__":
    key = jax.random.PRNGKey(0)
    kx, kp = jax.random.split(key)
    N, C, H, W = 2, 8, 16, 16          # out_ch = 8, t = 2; W*C = 128 lanes
    x = jax.random.normal(kx, (N, C, H, W), jnp.float32)
    params = init_params(kp, C)

    out = recurrent_block_forward(x, params, t=2)
    out = jax.block_until_ready(out)

    assert out.shape == (N, C, H, W)
    assert bool(jnp.all(jnp.isfinite(out)))
    ref = _reference(x, params, t=2)
    err = float(jnp.max(jnp.abs(out - ref)))
    assert bool(jnp.allclose(out, ref, rtol=5e-2, atol=5e-2)), f"max abs err={err}"

    print("KERNEL_OK")
</pallas_src>

<mosaic_0001>
module attributes {stable_mosaic.version = 11 : i64} {
  func.func @_recurrent_block_kernel(%arg0: i32, %arg1: memref<36x128xbf16, #tpu.memory_space<vmem>>, %arg2: memref<3x128x128xbf16, #tpu.memory_space<vmem>>, %arg3: memref<128x128xf32, #tpu.memory_space<vmem>>, %arg4: memref<1x128xf32, #tpu.memory_space<vmem>>, %arg5: memref<1x128xf32, #tpu.memory_space<vmem>>, %arg6: memref<32x128xf32, #tpu.memory_space<vmem>>, %arg7: memref<36x128xbf16, #tpu.memory_space<vmem>>) attributes {dimension_semantics = [#tpu.dimension_semantics<arbitrary>], iteration_bounds = array<i64: 1>, scalar_prefetch = 0 : i64, scratch_operands = 1 : i64, tpu.core_type = #tpu.core_type<tc>, window_params = [{pipeline_mode = #tpu.pipeline_mode<synchronous>, transform_indices = @transform_0, window_bounds = array<i64: 36, 128>}, {pipeline_mode = #tpu.pipeline_mode<synchronous>, transform_indices = @transform_1, window_bounds = array<i64: 3, 128, 128>}, {pipeline_mode = #tpu.pipeline_mode<synchronous>, transform_indices = @transform_2, window_bounds = array<i64: 128, 128>}, {pipeline_mode = #tpu.pipeline_mode<synchronous>, transform_indices = @transform_3, window_bounds = array<i64: 1, 128>}, {pipeline_mode = #tpu.pipeline_mode<synchronous>, transform_indices = @transform_4, window_bounds = array<i64: 1, 128>}, {pipeline_mode = #tpu.pipeline_mode<synchronous>, transform_indices = @transform_5, window_bounds = array<i64: 32, 128>}]} {
    %c0 = arith.constant 0 : index
    %c0_0 = arith.constant 0 : index
    %0 = vector.load %arg1[%c0, %c0_0] : memref<36x128xbf16, #tpu.memory_space<vmem>>, vector<32x128xbf16>
    %c0_1 = arith.constant 0 : index
    %c0_2 = arith.constant 0 : index
    %c0_3 = arith.constant 0 : index
    %1 = vector.load %arg2[%c0_1, %c0_2, %c0_3] : memref<3x128x128xbf16, #tpu.memory_space<vmem>>, vector<1x128x128xbf16>
    %2 = vector.shape_cast %1 : vector<1x128x128xbf16> to vector<128x128xbf16>
    %cst = arith.constant dense<0.000000e+00> : vector<32x128xf32>
    %3 = tpu.matmul %0, %2, %cst {dimension_numbers = #tpu.dot_dimension_numbers<[1], [0], [0], [1], [0, 0, 1, 1], [], []>} : vector<32x128xbf16>, vector<128x128xbf16>, vector<32x128xf32> -> vector<32x128xf32>
    %c2 = arith.constant 2 : index
    %c0_4 = arith.constant 0 : index
    %4 = vector.load %arg1[%c2, %c0_4] : memref<36x128xbf16, #tpu.memory_space<vmem>>, vector<32x128xbf16>
    %c1 = arith.constant 1 : index
    %c0_5 = arith.constant 0 : index
    %c0_6 = arith.constant 0 : index
    %5 = vector.load %arg2[%c1, %c0_5, %c0_6] : memref<3x128x128xbf16, #tpu.memory_space<vmem>>, vector<1x128x128xbf16>
    %6 = vector.shape_cast %5 : vector<1x128x128xbf16> to vector<128x128xbf16>
    %cst_7 = arith.constant dense<0.000000e+00> : vector<32x128xf32>
    %7 = tpu.matmul %4, %6, %cst_7 {dimension_numbers = #tpu.dot_dimension_numbers<[1], [0], [0], [1], [0, 0, 1, 1], [], []>} : vector<32x128xbf16>, vector<128x128xbf16>, vector<32x128xf32> -> vector<32x128xf32>
    %8 = arith.addf %3, %7 : vector<32x128xf32>
    %c4 = arith.constant 4 : index
    %c0_8 = arith.constant 0 : index
    %9 = vector.load %arg1[%c4, %c0_8] : memref<36x128xbf16, #tpu.memory_space<vmem>>, vector<32x128xbf16>
    %c2_9 = arith.constant 2 : index
    %c0_10 = arith.constant 0 : index
    %c0_11 = arith.constant 0 : index
    %10 = vector.load %arg2[%c2_9, %c0_10, %c0_11] : memref<3x128x128xbf16, #tpu.memory_space<vmem>>, vector<1x128x128xbf16>
    %11 = vector.shape_cast %10 : vector<1x128x128xbf16> to vector<128x128xbf16>
    %cst_12 = arith.constant dense<0.000000e+00> : vector<32x128xf32>
    %12 = tpu.matmul %9, %11, %cst_12 {dimension_numbers = #tpu.dot_dimension_numbers<[1], [0], [0], [1], [0, 0, 1, 1], [], []>} : vector<32x128xbf16>, vector<128x128xbf16>, vector<32x128xf32> -> vector<32x128xf32>
    %13 = arith.addf %8, %12 : vector<32x128xf32>
    %cst_13 = arith.constant dense<0.000000e+00> : vector<128xf32>
    %14 = vector.multi_reduction <add>, %13, %cst_13 [0] : vector<32x128xf32> to vector<128xf32>
    %15 = vector.shape_cast %14 : vector<128xf32> to vector<1x128xf32>
    %16 = arith.mulf %13, %13 : vector<32x128xf32>
    %cst_14 = arith.constant dense<0.000000e+00> : vector<128xf32>
    %17 = vector.multi_reduction <add>, %16, %cst_14 [0] : vector<32x128xf32> to vector<128xf32>
    %18 = vector.shape_cast %17 : vector<128xf32> to vector<1x128xf32>
    %c0_15 = arith.constant 0 : index
    %c0_16 = arith.constant 0 : index
    %19 = vector.load %arg3[%c0_15, %c0_16] : memref<128x128xf32, #tpu.memory_space<vmem>>, vector<128x128xf32>
    %cst_17 = arith.constant dense<0.000000e+00> : vector<1x128xf32>
    %20 = tpu.matmul %15, %19, %cst_17 {dimension_numbers = #tpu.dot_dimension_numbers<[1], [0], [0], [1], [0, 0, 1, 1], [], []>} : vector<1x128xf32>, vector<128x128xf32>, vector<1x128xf32> -> vector<1x128xf32>
    %cst_18 = arith.constant 1.000000e+00 : f32
    %21 = vector.broadcast %cst_18 : f32 to vector<1x128xf32>
    %22 = arith.mulf %20, %21 : vector<1x128xf32>
    %c0_19 = arith.constant 0 : index
    %c0_20 = arith.constant 0 : index
    %23 = vector.load %arg3[%c0_19, %c0_20] : memref<128x128xf32, #tpu.memory_space<vmem>>, vector<128x128xf32>
    %cst_21 = arith.constant dense<0.000000e+00> : vector<1x128xf32>
    %24 = tpu.matmul %18, %23, %cst_21 {dimension_numbers = #tpu.dot_dimension_numbers<[1], [0], [0], [1], [0, 0, 1, 1], [], []>} : vector<1x128xf32>, vector<128x128xf32>, vector<1x128xf32> -> vector<1x128xf32>
    %cst_22 = arith.constant 1.000000e+00 : f32
    %25 = vector.broadcast %cst_22 : f32 to vector<1x128xf32>
    %26 = arith.mulf %24, %25 : vector<1x128xf32>
    %27 = arith.mulf %22, %22 : vector<1x128xf32>
    %28 = arith.subf %26, %27 : vector<1x128xf32>
    %c0_23 = arith.constant 0 : index
    %c0_24 = arith.constant 0 : index
    %29 = vector.load %arg4[%c0_23, %c0_24] : memref<1x128xf32, #tpu.memory_space<vmem>>, vector<1x128xf32>
    %cst_25 = arith.constant 9.99999974E-6 : f32
    %30 = vector.broadcast %cst_25 : f32 to vector<1x128xf32>
    %31 = arith.addf %28, %30 : vector<1x128xf32>
    %32 = math.rsqrt %31 : vector<1x128xf32>
    %33 = arith.mulf %29, %32 : vector<1x128xf32>
    %c0_26 = arith.constant 0 : index
    %c0_27 = arith.constant 0 : index
    %34 = vector.load %arg5[%c0_26, %c0_27] : memref<1x128xf32, #tpu.memory_space<vmem>>, vector<1x128xf32>
    %35 = arith.mulf %22, %33 : vector<1x128xf32>
    %36 = arith.subf %34, %35 : vector<1x128xf32>
    %cst_28 = arith.constant 1.000000e+00 : f32
    %37 = vector.broadcast %cst_28 : f32 to vector<1x128xf32>
    %38 = arith.mulf %37, %33 : vector<1x128xf32>
    %39 = vector.broadcast %38 : vector<1x128xf32> to vector<32x128xf32>
    %40 = arith.mulf %13, %39 : vector<32x128xf32>
    %41 = vector.broadcast %36 : vector<1x128xf32> to vector<32x128xf32>
    %42 = arith.addf %40, %41 : vector<32x128xf32>
    %cst_29 = arith.constant 0.000000e+00 : f32
    %43 = vector.broadcast %cst_29 : f32 to vector<32x128xf32>
    %44 = arith.maximumf %42, %43 : vector<32x128xf32>
    %cst_30 = arith.constant 0.000000e+00 : bf16
    %45 = vector.broadcast %cst_30 : bf16 to vector<2x128xbf16>
    %c0_31 = arith.constant 0 : index
    %c0_32 = arith.constant 0 : index
    %46 = vector.load %arg7[%c0_31, %c0_32] : memref<36x128xbf16, #tpu.memory_space<vmem>>, vector<2x128xbf16>
    tpu.vector_store %arg7[%c0_31, %c0_32], %45 {strides = array<i32>} : memref<36x128xbf16, #tpu.memory_space<vmem>>, vector<2x128xbf16>,
    %c34 = arith.constant 34 : index
    %c0_33 = arith.constant 0 : index
    %47 = vector.load %arg7[%c34, %c0_33] : memref<36x128xbf16, #tpu.memory_space<vmem>>, vector<2x128xbf16>
    tpu.vector_store %arg7[%c34, %c0_33], %45 {strides = array<i32>} : memref<36x128xbf16, #tpu.memory_space<vmem>>, vector<2x128xbf16>,
    %48 = arith.truncf %44 : vector<32x128xf32> to vector<32x128xbf16>
    %c2_34 = arith.constant 2 : index
    %c0_35 = arith.constant 0 : index
    %49 = vector.load %arg7[%c2_34, %c0_35] : memref<36x128xbf16, #tpu.memory_space<vmem>>, vector<32x128xbf16>
    tpu.vector_store %arg7[%c2_34, %c0_35], %48 {strides = array<i32>} : memref<36x128xbf16, #tpu.memory_space<vmem>>, vector<32x128xbf16>,
    %c0_36 = arith.constant 0 : index
    %c0_37 = arith.constant 0 : index
    %50 = vector.load %arg7[%c0_36, %c0_37] : memref<36x128xbf16, #tpu.memory_space<vmem>>, vector<32x128xbf16>
    %c0_38 = arith.constant 0 : index
    %c0_39 = arith.constant 0 : index
    %c0_40 = arith.constant 0 : index
    %51 = vector.load %arg2[%c0_38, %c0_39, %c0_40] : memref<3x128x128xbf16, #tpu.memory_space<vmem>>, vector<1x128x128xbf16>
    %52 = vector.shape_cast %51 : vector<1x128x128xbf16> to vector<128x128xbf16>
    %cst_41 = arith.constant dense<0.000000e+00> : vector<32x128xf32>
    %53 = tpu.matmul %50, %52, %cst_41 {dimension_numbers = #tpu.dot_dimension_numbers<[1], [0], [0], [1], [0, 0, 1, 1], [], []>} : vector<32x128xbf16>, vector<128x128xbf16>, vector<32x128xf32> -> vector<32x128xf32>
    %c2_42 = arith.constant 2 : index
    %c0_43 = arith.constant 0 : index
    %54 = vector.load %arg7[%c2_42, %c0_43] : memref<36x128xbf16, #tpu.memory_space<vmem>>, vector<32x128xbf16>
    %c1_44 = arith.constant 1 : index
    %c0_45 = arith.constant 0 : index
    %c0_46 = arith.constant 0 : index
    %55 = vector.load %arg2[%c1_44, %c0_45, %c0_46] : memref<3x128x128xbf16, #tpu.memory_space<vmem>>, vector<1x128x128xbf16>
    %56 = vector.shape_cast %55 : vector<1x128x128xbf16> to vector<128x128xbf16>
    %cst_47 = arith.constant dense<0.000000e+00> : vector<32x128xf32>
    %57 = tpu.matmul %54, %56, %cst_47 {dimension_numbers = #tpu.dot_dimension_numbers<[1], [0], [0], [1], [0, 0, 1, 1], [], []>} : vector<32x128xbf16>, vector<128x128xbf16>, vector<32x128xf32> -> vector<32x128xf32>
    %58 = arith.addf %53, %57 : vector<32x128xf32>
    %c4_48 = arith.constant 4 : index
    %c0_49 = arith.constant 0 : index
    %59 = vector.load %arg7[%c4_48, %c0_49] : memref<36x128xbf16, #tpu.memory_space<vmem>>, vector<32x128xbf16>
    %c2_50 = arith.constant 2 : index
    %c0_51 = arith.constant 0 : index
    %c0_52 = arith.constant 0 : index
    %60 = vector.load %arg2[%c2_50, %c0_51, %c0_52] : memref<3x128x128xbf16, #tpu.memory_space<vmem>>, vector<1x128x128xbf16>
    %61 = vector.shape_cast %60 : vector<1x128x128xbf16> to vector<128x128xbf16>
    %cst_53 = arith.constant dense<0.000000e+00> : vector<32x128xf32>
    %62 = tpu.matmul %59, %61, %cst_53 {dimension_numbers = #tpu.dot_dimension_numbers<[1], [0], [0], [1], [0, 0, 1, 1], [], []>} : vector<32x128xbf16>, vector<128x128xbf16>, vector<32x128xf32> -> vector<32x128xf32>
    %63 = arith.addf %58, %62 : vector<32x128xf32>
    %cst_54 = arith.constant dense<0.000000e+00> : vector<128xf32>
    %64 = vector.multi_reduction <add>, %63, %cst_54 [0] : vector<32x128xf32> to vector<128xf32>
    %65 = vector.shape_cast %64 : vector<128xf32> to vector<1x128xf32>
    %66 = arith.mulf %63, %63 : vector<32x128xf32>
    %cst_55 = arith.constant dense<0.000000e+00> : vector<128xf32>
    %67 = vector.multi_reduction <add>, %66, %cst_55 [0] : vector<32x128xf32> to vector<128xf32>
    %68 = vector.shape_cast %67 : vector<128xf32> to vector<1x128xf32>
    %c0_56 = arith.constant 0 : index
    %c0_57 = arith.constant 0 : index
    %69 = vector.load %arg3[%c0_56, %c0_57] : memref<128x128xf32, #tpu.memory_space<vmem>>, vector<128x128xf32>
    %cst_58 = arith.constant dense<0.000000e+00> : vector<1x128xf32>
    %70 = tpu.matmul %65, %69, %cst_58 {dimension_numbers = #tpu.dot_dimension_numbers<[1], [0], [0], [1], [0, 0, 1, 1], [], []>} : vector<1x128xf32>, vector<128x128xf32>, vector<1x128xf32> -> vector<1x128xf32>
    %cst_59 = arith.constant 2.000000e+00 : f32
    %71 = vector.broadcast %cst_59 : f32 to vector<1x128xf32>
    %72 = arith.mulf %70, %71 : vector<1x128xf32>
    %c0_60 = arith.constant 0 : index
    %c0_61 = arith.constant 0 : index
    %73 = vector.load %arg3[%c0_60, %c0_61] : memref<128x128xf32, #tpu.memory_space<vmem>>, vector<128x128xf32>
    %cst_62 = arith.constant dense<0.000000e+00> : vector<1x128xf32>
    %74 = tpu.matmul %68, %73, %cst_62 {dimension_numbers = #tpu.dot_dimension_numbers<[1], [0], [0], [1], [0, 0, 1, 1], [], []>} : vector<1x128xf32>, vector<128x128xf32>, vector<1x128xf32> -> vector<1x128xf32>
    %cst_63 = arith.constant 4.000000e+00 : f32
    %75 = vector.broadcast %cst_63 : f32 to vector<1x128xf32>
    %76 = arith.mulf %74, %75 : vector<1x128xf32>
    %77 = arith.mulf %72, %72 : vector<1x128xf32>
    %78 = arith.subf %76, %77 : vector<1x128xf32>
    %c0_64 = arith.constant 0 : index
    %c0_65 = arith.constant 0 : index
    %79 = vector.load %arg4[%c0_64, %c0_65] : memref<1x128xf32, #tpu.memory_space<vmem>>, vector<1x128xf32>
    %cst_66 = arith.constant 9.99999974E-6 : f32
    %80 = vector.broadcast %cst_66 : f32 to vector<1x128xf32>
    %81 = arith.addf %78, %80 : vector<1x128xf32>
    %82 = math.rsqrt %81 : vector<1x128xf32>
    %83 = arith.mulf %79, %82 : vector<1x128xf32>
    %c0_67 = arith.constant 0 : index
    %c0_68 = arith.constant 0 : index
    %84 = vector.load %arg5[%c0_67, %c0_68] : memref<1x128xf32, #tpu.memory_space<vmem>>, vector<1x128xf32>
    %85 = arith.mulf %72, %83 : vector<1x128xf32>
    %86 = arith.subf %84, %85 : vector<1x128xf32>
    %cst_69 = arith.constant 2.000000e+00 : f32
    %87 = vector.broadcast %cst_69 : f32 to vector<1x128xf32>
    %88 = arith.mulf %87, %83 : vector<1x128xf32>
    %89 = vector.broadcast %88 : vector<1x128xf32> to vector<32x128xf32>
    %90 = arith.mulf %63, %89 : vector<32x128xf32>
    %91 = vector.broadcast %86 : vector<1x128xf32> to vector<32x128xf32>
    %92 = arith.addf %90, %91 : vector<32x128xf32>
    %cst_70 = arith.constant 0.000000e+00 : f32
    %93 = vector.broadcast %cst_70 : f32 to vector<32x128xf32>
    %94 = arith.maximumf %92, %93 : vector<32x128xf32>
    %c0_71 = arith.constant 0 : index
    %c0_72 = arith.constant 0 : index
    %95 = vector.load %arg6[%c0_71, %c0_72] : memref<32x128xf32, #tpu.memory_space<vmem>>, vector<32x128xf32>
    tpu.vector_store %arg6[%c0_71, %c0_72], %94 {strides = array<i32>} : memref<32x128xf32, #tpu.memory_space<vmem>>, vector<32x128xf32>,
    return
  }
  func.func @transform_0(%arg0: i32) -> (i32, i32) {
    %c0_i32 = arith.constant 0 : i32
    %c0_i32_0 = arith.constant 0 : i32
    %c0_i32_1 = arith.constant 0 : i32
    return %c0_i32, %c0_i32_0 : i32, i32
  }
  func.func @transform_1(%arg0: i32) -> (i32, i32, i32) {
    %c0_i32 = arith.constant 0 : i32
    %c0_i32_0 = arith.constant 0 : i32
    %c0_i32_1 = arith.constant 0 : i32
    %c0_i32_2 = arith.constant 0 : i32
    return %c0_i32, %c0_i32_0, %c0_i32_1 : i32, i32, i32
  }
  func.func @transform_2(%arg0: i32) -> (i32, i32) {
    %c0_i32 = arith.constant 0 : i32
    %c0_i32_0 = arith.constant 0 : i32
    %c0_i32_1 = arith.constant 0 : i32
    return %c0_i32, %c0_i32_0 : i32, i32
  }
  func.func @transform_3(%arg0: i32) -> (i32, i32) {
    %c0_i32 = arith.constant 0 : i32
    %c0_i32_0 = arith.constant 0 : i32
    %c0_i32_1 = arith.constant 0 : i32
    return %c0_i32, %c0_i32_0 : i32, i32
  }
  func.func @transform_4(%arg0: i32) -> (i32, i32) {
    %c0_i32 = arith.constant 0 : i32
    %c0_i32_0 = arith.constant 0 : i32
    %c0_i32_1 = arith.constant 0 : i32
    return %c0_i32, %c0_i32_0 : i32, i32
  }
  func.func @transform_5(%arg0: i32) -> (i32, i32) {
    %c0_i32 = arith.constant 0 : i32
    %c0_i32_0 = arith.constant 0 : i32
    %c0_i32_1 = arith.constant 0 : i32
    return %c0_i32, %c0_i32_0 : i32, i32
  }
}

</mosaic_0001>

<llo_original>
// kernel: tile.13
$region0: #{tile.13}
  #allocation0 [shape = 's32[1]{0}', space=sflag, size = 0x4, scoped, tag = 'scoped memory for tile.13']
  %s0 = inlined_call_operand.vmem [shape: f32[8], index: 0, kind: input, shape index: {}]
  %s1 = inlined_call_operand.vmem [shape: f32[16,8], index: 1, kind: output, shape index: {}]
  // Predicated region
  $region2: #{tile.13} parent=0 // pred_check
    _
  $region3: #{tile.13} parent=0 // pred_check_branch
    %3 = sbr.rel (0) target = $region5
  $region4: #{tile.13} parent=0 // pred_region
    _
  $region5: #{tile.13} parent=0 // pred_fallthru
    _
  %v4 = vld [vmem:[%s0] ss:$0 sm:$0xff]
  %5 = vst [vmem:[%s1] sm:$0xff] %v4
  %s6 = scalar_lea.vmem %s1, 8
  %7 = vst [vmem:[%s6] sm:$0xff] %v4

// kernel: tile.14
$region0: #{tile.14}
  %s0 = inlined_call_operand.vmem [shape: f32[16,8], index: 0, kind: input, shape index: {}]
  %s1 = inlined_call_operand.vmem [shape: f32[1,128], index: 1, kind: output, shape index: {}]
  $region1: #{tile.14} parent=0
    #allocation0 [shape = 'u8[4096]{0}', space=vmem, size = 0x1000, scoped, tag = 'scoped mem for output reshape']
    %v2 = vld [vmem:[%s0] sm:$0x1]
    %vm3 = vcmask 64512
    %4 = vst.msk [vmem:[#allocation0] sm:$0x1] %vm3, %v2
    %s5 = scalar_lea.vmem %s0, 15
    %v6 = vld [vmem:[%s5] sm:$0x1]
    %7 = vrot.lane.b32.xlu0 %v6, 120
    %v8 = vpop.permute.xlu0 %7
    %vm9 = vcmask 1048512
    %10 = vst.msk [vmem:[#allocation0] sm:$0x1] %vm9, %v8
    %s11 = scalar_lea.vmem %s0, 14
    %v12 = vld [vmem:[%s11] sm:$0x1]
    %13 = vrot.lane.b32.xlu0 %v12, 112
    %v14 = vpop.permute.xlu0 %13
    %vm15 = vcmask 982912
    %16 = vst.msk [vmem:[#allocation0] sm:$0x1] %vm15, %v14
    %s17 = scalar_lea.vmem %s0, 13
    %v18 = vld [vmem:[%s17] sm:$0x1]
    %19 = vrot.lane.b32.xlu0 %v18, 104
    %v20 = vpop.permute.xlu0 %19
    %vm21 = vcmask 917312
    %22 = vst.msk [vmem:[#allocation0] sm:$0x1] %vm21, %v20
    %s23 = scalar_lea.vmem %s0, 12
    %v24 = vld [vmem:[%s23] sm:$0x1]
    %25 = vrot.lane.b32.xlu0 %v24, 96
    %v26 = vpop.permute.xlu0 %25
    %vm27 = vcmask 851712
    %28 = vst.msk [vmem:[#allocation0] sm:$0x1] %vm27, %v26
    %s29 = scalar_lea.vmem %s0, 11
    %v30 = vld [vmem:[%s29] sm:$0x1]
    %31 = vrot.lane.b32.xlu0 %v30, 88
    %v32 = vpop.permute.xlu0 %31
    %vm33 = vcmask 786112
    %34 = vst.msk [vmem:[#allocation0] sm:$0x1] %vm33, %v32
    %s35 = scalar_lea.vmem %s0, 10
    %v36 = vld [vmem:[%s35] sm:$0x1]
    %37 = vrot.lane.b32.xlu0 %v36, 80
    %v38 = vpop.permute.xlu0 %37
    %vm39 = vcmask 720512
    %40 = vst.msk [vmem:[#allocation0] sm:$0x1] %vm39, %v38
    %s41 = scalar_lea.vmem %s0, 9
    %v42 = vld [vmem:[%s41] sm:$0x1]
    %43 = vrot.lane.b32.xlu0 %v42, 72
    %v44 = vpop.permute.xlu0 %43
    %vm45 = vcmask 654912
    %46 = vst.msk [vmem:[#allocation0] sm:$0x1] %vm45, %v44
    %s47 = scalar_lea.vmem %s0, 8
    %v48 = vld [vmem:[%s47] sm:$0x1]
    %49 = vrot.lane.b32.xlu0 %v48, 64
    %v50 = vpop.permute.xlu0 %49
    %vm51 = vcmask 589312
    %52 = vst.msk [vmem:[#allocation0] sm:$0x1] %vm51, %v50
    %s53 = scalar_lea.vmem %s0, 7
    %v54 = vld [vmem:[%s53] sm:$0x1]
    %55 = vrot.lane.b32.xlu0 %v54, 56
    %v56 = vpop.permute.xlu0 %55
    %vm57 = vcmask 523712
    %58 = vst.msk [vmem:[#allocation0] sm:$0x1] %vm57, %v56
    %s59 = scalar_lea.vmem %s0, 6
    %v60 = vld [vmem:[%s59] sm:$0x1]
    %61 = vrot.lane.b32.xlu0 %v60, 48
    %v62 = vpop.permute.xlu0 %61
    %vm63 = vcmask 458112
    %64 = vst.msk [vmem:[#allocation0] sm:$0x1] %vm63, %v62
    %s65 = scalar_lea.vmem %s0, 5
    %v66 = vld [vmem:[%s65] sm:$0x1]
    %67 = vrot.lane.b32.xlu0 %v66, 40
    %v68 = vpop.permute.xlu0 %67
    %vm69 = vcmask 392512
    %70 = vst.msk [vmem:[#allocation0] sm:$0x1] %vm69, %v68
    %s71 = scalar_lea.vmem %s0, 4
    %v72 = vld [vmem:[%s71] sm:$0x1]
    %73 = vrot.lane.b32.xlu0 %v72, 32
    %v74 = vpop.permute.xlu0 %73
    %vm75 = vcmask 326912
    %76 = vst.msk [vmem:[#allocation0] sm:$0x1] %vm75, %v74
    %s77 = scalar_lea.vmem %s0, 3
    %v78 = vld [vmem:[%s77] sm:$0x1]
    %79 = vrot.lane.b32.xlu0 %v78, 24
    %v80 = vpop.permute.xlu0 %79
    %vm81 = vcmask 261312
    %82 = vst.msk [vmem:[#allocation0] sm:$0x1] %vm81, %v80
    %s83 = scalar_lea.vmem %s0, 2
    %v84 = vld [vmem:[%s83] sm:$0x1]
    %85 = vrot.lane.b32.xlu0 %v84, 16
    %v86 = vpop.permute.xlu0 %85
    %vm87 = vcmask 195712
    %88 = vst.msk [vmem:[#allocation0] sm:$0x1] %vm87, %v86
    %s89 = scalar_lea.vmem %s0, 1
    %v90 = vld [vmem:[%s89] sm:$0x1]
    %91 = vrot.lane.b32.xlu0 %v90, 8
    %v92 = vpop.permute.xlu0 %91
    %vm93 = vcmask 130112
    %94 = vst.msk [vmem:[#allocation0] sm:$0x1] %vm93, %v92
    %s96 = ssub.s32 2, 1
    %v97 = vld [vmem:[#allocation0] sm:%s96]
    %s99 = ssub.s32 2, 1
    %100 = vst [vmem:[%s1] sm:%s99] %v97

// kernel: recurrent_block_forward.1
$region0: #{recurrent_block_forward.1}
  #allocation0 [shape = 'u32[]', space=smem, size = 0x4, offset = 0x4, fixed_abs, tag = 'smem constant byte address 0x4 - core index']
  #allocation1 [shape = 'u32[72,128]{1,0:T(1,128)}', space=vmem, size = 0x9000, scoped, tag = 'internal scratch']
  #allocation2 [shape = 'bf16[36,128]{1,0:T(8,128)(2,1)}', space=vmem, size = 0x2800, scoped, tag = 'scratch operand']
  %s0 = inlined_call_operand.vmem [shape: bf16[36,128], index: 0, kind: input, shape index: {}]
  %s1 = inlined_call_operand.vmem [shape: bf16[3,128,128], index: 1, kind: input, shape index: {}]
  %s2 = inlined_call_operand.vmem [shape: f32[128,128], index: 2, kind: input, shape index: {}]
  %s3 = inlined_call_operand.vmem [shape: f32[1,128], index: 3, kind: input, shape index: {}]
  %s4 = inlined_call_operand.vmem [shape: f32[1,128], index: 4, kind: input, shape index: {}]
  %s5 = inlined_call_operand.vmem [shape: f32[32,128], index: 5, kind: output, shape index: {}]
  %s6 = sld [smem:[#allocation0]]
  $region30: #{recurrent_block_forward.1} parent=0
    _
  %s8 = ssub.s32 1, %s6
  %s9 = scalar_select 0, %s8, %s6
  // Predicated region
  $region2: #{recurrent_block_forward.1} parent=0 // pred_check
    _
  $region3: #{recurrent_block_forward.1} parent=0 // pred_check_branch
    %11 = sbr.rel (0) target = $region5
  $region4: #{recurrent_block_forward.1} parent=0 // pred_region
    _
  $region5: #{recurrent_block_forward.1} parent=0 // pred_fallthru
    _
  // Predicated region
  $region6: #{recurrent_block_forward.1} parent=0 // pred_check
    _
  $region7: #{recurrent_block_forward.1} parent=0 // pred_check_branch
    %13 = sbr.rel (0) target = $region9
  $region8: #{recurrent_block_forward.1} parent=0 // pred_region
    _
  $region9: #{recurrent_block_forward.1} parent=0 // pred_fallthru
    _
  // Predicated region
  $region10: #{recurrent_block_forward.1} parent=0 // pred_check
    _
  $region11: #{recurrent_block_forward.1} parent=0 // pred_check_branch
    %15 = sbr.rel (0) target = $region13
  $region12: #{recurrent_block_forward.1} parent=0 // pred_region
    _
  $region13: #{recurrent_block_forward.1} parent=0 // pred_fallthru
    _
  // Predicated region
  $region14: #{recurrent_block_forward.1} parent=0 // pred_check
    _
  $region15: #{recurrent_block_forward.1} parent=0 // pred_check_branch
    %17 = sbr.rel (0) target = $region17
  $region16: #{recurrent_block_forward.1} parent=0 // pred_region
    _
  $region17: #{recurrent_block_forward.1} parent=0 // pred_fallthru
    _
  // Predicated region
  $region18: #{recurrent_block_forward.1} parent=0 // pred_check
    _
  $region19: #{recurrent_block_forward.1} parent=0 // pred_check_branch
    %19 = sbr.rel (0) target = $region21
  $region20: #{recurrent_block_forward.1} parent=0 // pred_region
    _
  $region21: #{recurrent_block_forward.1} parent=0 // pred_fallthru
    _
  %v21 = vld [vmem:[%s0] sm:$0xf]
  %v22 = vld [vmem:[%s0 + $0x4] sm:$0xf]
  %v23 = vld [vmem:[%s0 + $0x8] sm:$0xf]
  %v24 = vld [vmem:[%s0 + $0xc] sm:$0xf]
  %v25 = vld [vmem:[%s1] sm:$0xf]
  %v26 = vld [vmem:[%s1 + $0x4] sm:$0xf]
  %v27 = vld [vmem:[%s1 + $0x8] sm:$0xf]
  %v28 = vld [vmem:[%s1 + $0xc] sm:$0xf]
  %v29 = vld [vmem:[%s1 + $0x10] sm:$0xf]
  %v30 = vld [vmem:[%s1 + $0x14] sm:$0xf]
  %v31 = vld [vmem:[%s1 + $0x18] sm:$0xf]
  %v32 = vld [vmem:[%s1 + $0x1c] sm:$0xf]
  %v33 = vld [vmem:[%s1 + $0x20] sm:$0xf]
  %v34 = vld [vmem:[%s1 + $0x24] sm:$0xf]
  %v35 = vld [vmem:[%s1 + $0x28] sm:$0xf]
  %v36 = vld [vmem:[%s1 + $0x2c] sm:$0xf]
  %v37 = vld [vmem:[%s1 + $0x30] sm:$0xf]
  %v38 = vld [vmem:[%s1 + $0x34] sm:$0xf]
  %v39 = vld [vmem:[%s1 + $0x38] sm:$0xf]
  %v40 = vld [vmem:[%s1 + $0x3c] sm:$0xf]
  %v41 = vld [vmem:[%s0] sm:$0xe]
  %v42 = vld [vmem:[%s0 + $0x10] sm:$0x1]
  %s43 = scalar_lea.vmem %s1, 64
  %v44 = vld [vmem:[%s43] sm:$0xf]
  %v45 = vld [vmem:[%s43 + $0x4] sm:$0xf]
  %v46 = vld [vmem:[%s43 + $0x8] sm:$0xf]
  %v47 = vld [vmem:[%s43 + $0xc] sm:$0xf]
  %v48 = vld [vmem:[%s43 + $0x10] sm:$0xf]
  %v49 = vld [vmem:[%s43 + $0x14] sm:$0xf]
  %v50 = vld [vmem:[%s43 + $0x18] sm:$0xf]
  %v51 = vld [vmem:[%s43 + $0x1c] sm:$0xf]
  %v52 = vld [vmem:[%s43 + $0x20] sm:$0xf]
  %v53 = vld [vmem:[%s43 + $0x24] sm:$0xf]
  %v54 = vld [vmem:[%s43 + $0x28] sm:$0xf]
  %v55 = vld [vmem:[%s43 + $0x2c] sm:$0xf]
  %v56 = vld [vmem:[%s43 + $0x30] sm:$0xf]
  %v57 = vld [vmem:[%s43 + $0x34] sm:$0xf]
  %v58 = vld [vmem:[%s43 + $0x38] sm:$0xf]
  %v59 = vld [vmem:[%s43 + $0x3c] sm:$0xf]
  %v65 = vunpack.c.l.b16 %v41
  %v66 = vunpack.c.l.b16 %v22
  %v67 = vunpack.c.l.b16 %v23
  %v68 = vunpack.c.l.b16 %v24
  %v69 = vunpack.c.l.b16 %v42
  %v70 = vpack.c.b16 %v66, %v65
  %v71 = vpack.c.b16 %v68, %v67
  %v72 = vpack.c.b16 %v69, %v69
  %vm73 = vcmask 1046528
  %v74 = vrot.slane %v70, 1
  %v75 = vrot.slane %v71, 1
  %v76 = vsel %vm73, %v74, %v75
  %v77 = vrot.slane %v72, 1
  %v78 = vsel %vm73, %v75, %v77
  %v97 = vunpack.c.l.b16 %v44
  %v98 = vunpack.c.l.b16 %v45
  %v99 = vunpack.c.l.b16 %v46
  %v100 = vunpack.c.l.b16 %v47
  %v101 = vunpack.c.l.b16 %v48
  %v102 = vunpack.c.l.b16 %v49
  %v103 = vunpack.c.l.b16 %v50
  %v104 = vunpack.c.l.b16 %v51
  %v105 = vunpack.c.l.b16 %v52
  %v106 = vunpack.c.l.b16 %v53
  %v107 = vunpack.c.l.b16 %v54
  %v108 = vunpack.c.l.b16 %v55
  %v109 = vunpack.c.l.b16 %v56
  %v110 = vunpack.c.l.b16 %v57
  %v111 = vunpack.c.l.b16 %v58
  %v112 = vunpack.c.l.b16 %v59
  %v113 = vpack.c.b16 %v98, %v97
  %v114 = vpack.c.b16 %v100, %v99
  %v115 = vpack.c.b16 %v102, %v101
  %v116 = vpack.c.b16 %v104, %v103
  %v117 = vpack.c.b16 %v106, %v105
  %v118 = vpack.c.b16 %v108, %v107
  %v119 = vpack.c.b16 %v110, %v109
  %v120 = vpack.c.b16 %v112, %v111
  %129 = vmatpush.bf16.msra.mxu0 %v120
  %130 = vmatpush.bf16.msra.mxu0 %v119
  %131 = vmatpush.bf16.msra.mxu0 %v118
  %132 = vmatpush.bf16.msra.mxu0 %v117
  %133 = vmatpush.bf16.msra.mxu0 %v116
  %134 = vmatpush.bf16.msra.mxu0 %v115
  %135 = vmatpush.bf16.msra.mxu0 %v114
  %136 = vmatpush.bf16.msra.mxu0 %v113
  %137 = vmatmul.bf16.gmra.mxu0 %v76
  %v138 = vpop.f32.mrf.mxu0
  %v139 = vadd.f32 0.0, %v138
  %v140 = vpop.f32.mrf.mxu0
  %v141 = vadd.f32 0.0, %v140
  %142 = vmatmul.bf16.gmra.mxu0 %v78
  %v143 = vpop.f32.mrf.mxu0
  %v144 = vadd.f32 0.0, %v143
  %v145 = vpop.f32.mrf.mxu0
  %v146 = vadd.f32 0.0, %v145
  %147 = vdwg.mxu0
  %v149 = vunpack.c.l.b16 %v21
  %v150 = vpack.c.b16 %v66, %v149
  %v169 = vunpack.c.l.b16 %v25
  %v170 = vunpack.c.l.b16 %v26
  %v171 = vunpack.c.l.b16 %v27
  %v172 = vunpack.c.l.b16 %v28
  %v173 = vunpack.c.l.b16 %v29
  %v174 = vunpack.c.l.b16 %v30
  %v175 = vunpack.c.l.b16 %v31
  %v176 = vunpack.c.l.b16 %v32
  %v177 = vunpack.c.l.b16 %v33
  %v178 = vunpack.c.l.b16 %v34
  %v179 = vunpack.c.l.b16 %v35
  %v180 = vunpack.c.l.b16 %v36
  %v181 = vunpack.c.l.b16 %v37
  %v182 = vunpack.c.l.b16 %v38
  %v183 = vunpack.c.l.b16 %v39
  %v184 = vunpack.c.l.b16 %v40
  %v185 = vpack.c.b16 %v170, %v169
  %v186 = vpack.c.b16 %v172, %v171
  %v187 = vpack.c.b16 %v174, %v173
  %v188 = vpack.c.b16 %v176, %v175
  %v189 = vpack.c.b16 %v178, %v177
  %v190 = vpack.c.b16 %v180, %v179
  %v191 = vpack.c.b16 %v182, %v181
  %v192 = vpack.c.b16 %v184, %v183
  %201 = vmatpush.bf16.msra.mxu0 %v192
  %202 = vmatpush.bf16.msra.mxu0 %v191
  %203 = vmatpush.bf16.msra.mxu0 %v190
  %204 = vmatpush.bf16.msra.mxu0 %v189
  %205 = vmatpush.bf16.msra.mxu0 %v188
  %206 = vmatpush.bf16.msra.mxu0 %v187
  %207 = vmatpush.bf16.msra.mxu0 %v186
  %208 = vmatpush.bf16.msra.mxu0 %v185
  %209 = vmatmul.bf16.gmra.mxu0 %v150
  %v210 = vpop.f32.mrf.mxu0
  %v211 = vadd.f32 %v139, %v210
  %v212 = vpop.f32.mrf.mxu0
  %v213 = vadd.f32 %v141, %v212
  %214 = vmatmul.bf16.gmra.mxu0 %v71
  %v215 = vpop.f32.mrf.mxu0
  %v216 = vadd.f32 %v144, %v215
  %v217 = vpop.f32.mrf.mxu0
  %v218 = vadd.f32 %v146, %v217
  %219 = vdwg.mxu0
  %v220 = vld [vmem:[%s0] sm:$0xc]
  %v221 = vld [vmem:[%s0 + $0x10] sm:$0x3]
  %s222 = scalar_lea.vmem %s1, 128
  %v223 = vld [vmem:[%s222] sm:$0xf]
  %v224 = vld [vmem:[%s222 + $0x4] sm:$0xf]
  %v225 = vld [vmem:[%s222 + $0x8] sm:$0xf]
  %v226 = vld [vmem:[%s222 + $0xc] sm:$0xf]
  %v227 = vld [vmem:[%s222 + $0x10] sm:$0xf]
  %v228 = vld [vmem:[%s222 + $0x14] sm:$0xf]
  %v229 = vld [vmem:[%s222 + $0x18] sm:$0xf]
  %v230 = vld [vmem:[%s222 + $0x1c] sm:$0xf]
  %v231 = vld [vmem:[%s222 + $0x20] sm:$0xf]
  %v232 = vld [vmem:[%s222 + $0x24] sm:$0xf]
  %v233 = vld [vmem:[%s222 + $0x28] sm:$0xf]
  %v234 = vld [vmem:[%s222 + $0x2c] sm:$0xf]
  %v235 = vld [vmem:[%s222 + $0x30] sm:$0xf]
  %v236 = vld [vmem:[%s222 + $0x34] sm:$0xf]
  %v237 = vld [vmem:[%s222 + $0x38] sm:$0xf]
  %v238 = vld [vmem:[%s222 + $0x3c] sm:$0xf]
  %v241 = vunpack.c.l.b16 %v220
  %v242 = vunpack.c.l.b16 %v221
  %v243 = vpack.c.b16 %v66, %v241
  %v244 = vpack.c.b16 %v242, %v242
  %vm245 = vcmask 1045504
  %v246 = vrot.slane %v243, 2
  %v247 = vrot.slane %v71, 2
  %v248 = vsel %vm245, %v246, %v247
  %v249 = vrot.slane %v244, 2
  %v250 = vsel %vm245, %v247, %v249
  %v269 = vunpack.c.l.b16 %v223
  %v270 = vunpack.c.l.b16 %v224
  %v271 = vunpack.c.l.b16 %v225
  %v272 = vunpack.c.l.b16 %v226
  %v273 = vunpack.c.l.b16 %v227
  %v274 = vunpack.c.l.b16 %v228
  %v275 = vunpack.c.l.b16 %v229
  %v276 = vunpack.c.l.b16 %v230
  %v277 = vunpack.c.l.b16 %v231
  %v278 = vunpack.c.l.b16 %v232
  %v279 = vunpack.c.l.b16 %v233
  %v280 = vunpack.c.l.b16 %v234
  %v281 = vunpack.c.l.b16 %v235
  %v282 = vunpack.c.l.b16 %v236
  %v283 = vunpack.c.l.b16 %v237
  %v284 = vunpack.c.l.b16 %v238
  %v285 = vpack.c.b16 %v270, %v269
  %v286 = vpack.c.b16 %v272, %v271
  %v287 = vpack.c.b16 %v274, %v273
  %v288 = vpack.c.b16 %v276, %v275
  %v289 = vpack.c.b16 %v278, %v277
  %v290 = vpack.c.b16 %v280, %v279
  %v291 = vpack.c.b16 %v282, %v281
  %v292 = vpack.c.b16 %v284, %v283
  %301 = vmatpush.bf16.msra.mxu0 %v292
  %302 = vmatpush.bf16.msra.mxu0 %v291
  %303 = vmatpush.bf16.msra.mxu0 %v290
  %304 = vmatpush.bf16.msra.mxu0 %v289
  %305 = vmatpush.bf16.msra.mxu0 %v288
  %306 = vmatpush.bf16.msra.mxu0 %v287
  %307 = vmatpush.bf16.msra.mxu0 %v286
  %308 = vmatpush.bf16.msra.mxu0 %v285
  %309 = vmatmul.bf16.gmra.mxu0 %v248
  %v310 = vpop.f32.mrf.mxu0
  %v311 = vadd.f32 0.0, %v310
  %v312 = vpop.f32.mrf.mxu0
  %v313 = vadd.f32 0.0, %v312
  %314 = vmatmul.bf16.gmra.mxu0 %v250
  %v315 = vpop.f32.mrf.mxu0
  %v316 = vadd.f32 0.0, %v315
  %v317 = vpop.f32.mrf.mxu0
  %v318 = vadd.f32 0.0, %v317
  %319 = vdwg.mxu0
  %v320 = vadd.f32 %v211, %v311
  %v321 = vadd.f32 %v213, %v313
  %v322 = vadd.f32 %v216, %v316
  %v323 = vadd.f32 %v218, %v318
  %v324 = vadd.f32 %v320, %v321
  %v325 = vadd.f32 %v324, %v322
  %v326 = vadd.f32 %v325, %v323
  %v327 = vrot.slane %v326, 4
  %v328 = vadd.f32 %v326, %v327
  %v329 = vrot.slane %v328, 2
  %v330 = vadd.f32 %v328, %v329
  %v331 = vrot.slane %v330, 1
  %v332 = vadd.f32 %v330, %v331
  %v333 = vmul.f32 %v320, %v320
  %v334 = vmul.f32 %v321, %v321
  %v335 = vmul.f32 %v322, %v322
  %v336 = vmul.f32 %v323, %v323
  %v337 = vadd.f32 %v333, %v334
  %v338 = vadd.f32 %v337, %v335
  %v339 = vadd.f32 %v338, %v336
  %v340 = vrot.slane %v339, 4
  %v341 = vadd.f32 %v339, %v340
  %v342 = vrot.slane %v341, 2
  %v343 = vadd.f32 %v341, %v342
  %v344 = vrot.slane %v343, 1
  %v345 = vadd.f32 %v343, %v344
  %v346 = vld [vmem:[%s2] sm:$0xff]
  %v347 = vld [vmem:[%s2 + $0x8] sm:$0xff]
  %v348 = vld [vmem:[%s2 + $0x10] sm:$0xff]
  %v349 = vld [vmem:[%s2 + $0x18] sm:$0xff]
  %v350 = vld [vmem:[%s2 + $0x20] sm:$0xff]
  %v351 = vld [vmem:[%s2 + $0x28] sm:$0xff]
  %v352 = vld [vmem:[%s2 + $0x30] sm:$0xff]
  %v353 = vld [vmem:[%s2 + $0x38] sm:$0xff]
  %v354 = vld [vmem:[%s2 + $0x40] sm:$0xff]
  %v355 = vld [vmem:[%s2 + $0x48] sm:$0xff]
  %v356 = vld [vmem:[%s2 + $0x50] sm:$0xff]
  %v357 = vld [vmem:[%s2 + $0x58] sm:$0xff]
  %v358 = vld [vmem:[%s2 + $0x60] sm:$0xff]
  %v359 = vld [vmem:[%s2 + $0x68] sm:$0xff]
  %v360 = vld [vmem:[%s2 + $0x70] sm:$0xff]
  %v361 = vld [vmem:[%s2 + $0x78] sm:$0xff]
  %362 = vmatpush.msra.mxu0 %v361
  %363 = vmatpush.msra.mxu0 %v360
  %364 = vmatpush.msra.mxu0 %v359
  %365 = vmatpush.msra.mxu0 %v358
  %366 = vmatpush.msra.mxu0 %v357
  %367 = vmatpush.msra.mxu0 %v356
  %368 = vmatpush.msra.mxu0 %v355
  %369 = vmatpush.msra.mxu0 %v354
  %370 = vmatpush.msra.mxu0 %v353
  %371 = vmatpush.msra.mxu0 %v352
  %372 = vmatpush.msra.mxu0 %v351
  %373 = vmatpush.msra.mxu0 %v350
  %374 = vmatpush.msra.mxu0 %v349
  %375 = vmatpush.msra.mxu0 %v348
  %376 = vmatpush.msra.mxu0 %v347
  %377 = vmatpush.msra.mxu0 %v346
  %378 = vmatmul.f32.gmra.mxu0 %v332
  %v379 = vpop.f32.mrf.mxu0
  %v380 = vadd.f32 0.0, %v379
  %381 = vdwg.mxu0
  %382 = vmatpush.msra.mxu0 %v361
  %383 = vmatpush.msra.mxu0 %v360
  %384 = vmatpush.msra.mxu0 %v359
  %385 = vmatpush.msra.mxu0 %v358
  %386 = vmatpush.msra.mxu0 %v357
  %387 = vmatpush.msra.mxu0 %v356
  %388 = vmatpush.msra.mxu0 %v355
  %389 = vmatpush.msra.mxu0 %v354
  %390 = vmatpush.msra.mxu0 %v353
  %391 = vmatpush.msra.mxu0 %v352
  %392 = vmatpush.msra.mxu0 %v351
  %393 = vmatpush.msra.mxu0 %v350
  %394 = vmatpush.msra.mxu0 %v349
  %395 = vmatpush.msra.mxu0 %v348
  %396 = vmatpush.msra.mxu0 %v347
  %397 = vmatpush.msra.mxu0 %v346
  %398 = vmatmul.f32.gmra.mxu0 %v345
  %v399 = vpop.f32.mrf.mxu0
  %v400 = vadd.f32 0.0, %v399
  %401 = vdwg.mxu0
  %v402 = vmul.f32 %v380, %v380
  %v403 = vsub.f32 %v400, %v402
  %v404 = vld [vmem:[%s3] sm:$0x1]
  %v405 = vadd.f32 %v403, 1e-05
  %v406 = vrsqrt.pop %v405
  %v407 = vmul.f32 %v406, %v405
  %v408 = vmul.f32 %v407, %v406
  %v409 = vmul.f32 0.5, %v408
  %v410 = vsub.f32 1.5, %v409
  %v411 = vmul.f32 %v406, %v410
  %vm412 = vweird.f32 %v405
  %vm413 = vweird.f32 %v406
  %vm414 = vmor %vm412, %vm413
  %v415 = vsel %vm414, %v406, %v411
  %v416 = vmul.f32 %v404, %v415
  %v417 = vld [vmem:[%s4] sm:$0x1]
  %v418 = vmul.f32 %v380, %v416
  %v419 = vsub.f32 %v417, %v418
  %v421 = vperm.slane %v416, 0
  %v423 = vmul.f32 %v320, %v421
  %v424 = vmul.f32 %v321, %v421
  %v425 = vmul.f32 %v322, %v421
  %v426 = vmul.f32 %v323, %v421
  %v428 = vperm.slane %v419, 0
  %v430 = vadd.f32 %v423, %v428
  %v431 = vadd.f32 %v424, %v428
  %v432 = vadd.f32 %v425, %v428
  %v433 = vadd.f32 %v426, %v428
  %v434 = vmax.f32 %v430, 0.0
  %v435 = vmax.f32 %v431, 0.0
  %v436 = vmax.f32 %v432, 0.0
  %v437 = vmax.f32 %v433, 0.0
  %438 = vst [vmem:[#allocation2] sm:$0x1] 0
  %439 = vst [vmem:[#allocation2 + $0x10] sm:$0x2] 0
  %v440 = vpack.c.bf16 %v434, %v434
  %v441 = vpack.c.bf16 %v435, %v435
  %v442 = vpack.c.bf16 %v436, %v436
  %v443 = vpack.c.bf16 %v437, %v437
  %vm448 = vcmask 1040384
  %vm449 = vcmask 1044484
  %vm450 = vmor %vm448, %vm449
  %v451 = vrot.slane %v440, 7
  %v452 = vrot.slane %v451, 4
  %v453 = vrot.slane %v441, 7
  %v454 = vsel %vm450, %v452, %v453
  %v455 = vrot.slane %v453, 4
  %v456 = vrot.slane %v442, 7
  %v457 = vsel %vm450, %v455, %v456
  %v458 = vrot.slane %v456, 4
  %v459 = vrot.slane %v443, 7
  %v460 = vsel %vm450, %v458, %v459
  %v461 = vrot.slane %v459, 4
  %467 = vst [vmem:[#allocation2] sm:$0xe] %v451
  %468 = vst [vmem:[#allocation2 + $0x4] sm:$0xf] %v454
  %469 = vst [vmem:[#allocation2 + $0x8] sm:$0xf] %v457
  %470 = vst [vmem:[#allocation2 + $0xc] sm:$0xf] %v460
  %471 = vst [vmem:[#allocation2 + $0x10] sm:$0x1] %v461
  %v472 = vld [vmem:[#allocation2] sm:$0xf]
  %v473 = vld [vmem:[#allocation2 + $0x4] sm:$0xf]
  %v474 = vld [vmem:[#allocation2 + $0x8] sm:$0xf]
  %v475 = vld [vmem:[#allocation2 + $0xc] sm:$0xf]
  %v476 = vld [vmem:[%s1] sm:$0xf]
  %v477 = vld [vmem:[%s1 + $0x4] sm:$0xf]
  %v478 = vld [vmem:[%s1 + $0x8] sm:$0xf]
  %v479 = vld [vmem:[%s1 + $0xc] sm:$0xf]
  %v480 = vld [vmem:[%s1 + $0x10] sm:$0xf]
  %v481 = vld [vmem:[%s1 + $0x14] sm:$0xf]
  %v482 = vld [vmem:[%s1 + $0x18] sm:$0xf]
  %v483 = vld [vmem:[%s1 + $0x1c] sm:$0xf]
  %v484 = vld [vmem:[%s1 + $0x20] sm:$0xf]
  %v485 = vld [vmem:[%s1 + $0x24] sm:$0xf]
  %v486 = vld [vmem:[%s1 + $0x28] sm:$0xf]
  %v487 = vld [vmem:[%s1 + $0x2c] sm:$0xf]
  %v488 = vld [vmem:[%s1 + $0x30] sm:$0xf]
  %v489 = vld [vmem:[%s1 + $0x34] sm:$0xf]
  %v490 = vld [vmem:[%s1 + $0x38] sm:$0xf]
  %v491 = vld [vmem:[%s1 + $0x3c] sm:$0xf]
  %v492 = vld [vmem:[#allocation2] sm:$0xe]
  %v493 = vld [vmem:[#allocation2 + $0x10] sm:$0x1]
  %v494 = vld [vmem:[%s43] sm:$0xf]
  %v495 = vld [vmem:[%s43 + $0x4] sm:$0xf]
  %v496 = vld [vmem:[%s43 + $0x8] sm:$0xf]
  %v497 = vld [vmem:[%s43 + $0xc] sm:$0xf]
  %v498 = vld [vmem:[%s43 + $0x10] sm:$0xf]
  %v499 = vld [vmem:[%s43 + $0x14] sm:$0xf]
  %v500 = vld [vmem:[%s43 + $0x18] sm:$0xf]
  %v501 = vld [vmem:[%s43 + $0x1c] sm:$0xf]
  %v502 = vld [vmem:[%s43 + $0x20] sm:$0xf]
  %v503 = vld [vmem:[%s43 + $0x24] sm:$0xf]
  %v504 = vld [vmem:[%s43 + $0x28] sm:$0xf]
  %v505 = vld [vmem:[%s43 + $0x2c] sm:$0xf]
  %v506 = vld [vmem:[%s43 + $0x30] sm:$0xf]
  %v507 = vld [vmem:[%s43 + $0x34] sm:$0xf]
  %v508 = vld [vmem:[%s43 + $0x38] sm:$0xf]
  %v509 = vld [vmem:[%s43 + $0x3c] sm:$0xf]
  %v515 = vunpack.c.l.b16 %v492
  %v516 = vunpack.c.l.b16 %v473
  %v517 = vunpack.c.l.b16 %v474
  %v518 = vunpack.c.l.b16 %v475
  %v519 = vunpack.c.l.b16 %v493
  %v520 = vpack.c.b16 %v516, %v515
  %v521 = vpack.c.b16 %v518, %v517
  %v522 = vpack.c.b16 %v519, %v519
  %v523 = vrot.slane %v520, 1
  %v524 = vrot.slane %v521, 1
  %v525 = vsel %vm73, %v523, %v524
  %v526 = vrot.slane %v522, 1
  %v527 = vsel %vm73, %v524, %v526
  %v546 = vunpack.c.l.b16 %v494
  %v547 = vunpack.c.l.b16 %v495
  %v548 = vunpack.c.l.b16 %v496
  %v549 = vunpack.c.l.b16 %v497
  %v550 = vunpack.c.l.b16 %v498
  %v551 = vunpack.c.l.b16 %v499
  %v552 = vunpack.c.l.b16 %v500
  %v553 = vunpack.c.l.b16 %v501
  %v554 = vunpack.c.l.b16 %v502
  %v555 = vunpack.c.l.b16 %v503
  %v556 = vunpack.c.l.b16 %v504
  %v557 = vunpack.c.l.b16 %v505
  %v558 = vunpack.c.l.b16 %v506
  %v559 = vunpack.c.l.b16 %v507
  %v560 = vunpack.c.l.b16 %v508
  %v561 = vunpack.c.l.b16 %v509
  %v562 = vpack.c.b16 %v547, %v546
  %v563 = vpack.c.b16 %v549, %v548
  %v564 = vpack.c.b16 %v551, %v550
  %v565 = vpack.c.b16 %v553, %v552
  %v566 = vpack.c.b16 %v555, %v554
  %v567 = vpack.c.b16 %v557, %v556
  %v568 = vpack.c.b16 %v559, %v558
  %v569 = vpack.c.b16 %v561, %v560
  %578 = vmatpush.bf16.msra.mxu0 %v569
  %579 = vmatpush.bf16.msra.mxu0 %v568
  %580 = vmatpush.bf16.msra.mxu0 %v567
  %581 = vmatpush.bf16.msra.mxu0 %v566
  %582 = vmatpush.bf16.msra.mxu0 %v565
  %583 = vmatpush.bf16.msra.mxu0 %v564
  %584 = vmatpush.bf16.msra.mxu0 %v563
  %585 = vmatpush.bf16.msra.mxu0 %v562
  %586 = vmatmul.bf16.gmra.mxu0 %v525
  %v587 = vpop.f32.mrf.mxu0
  %v588 = vadd.f32 0.0, %v587
  %v589 = vpop.f32.mrf.mxu0
  %v590 = vadd.f32 0.0, %v589
  %591 = vmatmul.bf16.gmra.mxu0 %v527
  %v592 = vpop.f32.mrf.mxu0
  %v593 = vadd.f32 0.0, %v592
  %v594 = vpop.f32.mrf.mxu0
  %v595 = vadd.f32 0.0, %v594
  %596 = vdwg.mxu0
  %v598 = vunpack.c.l.b16 %v472
  %v599 = vpack.c.b16 %v516, %v598
  %v618 = vunpack.c.l.b16 %v476
  %v619 = vunpack.c.l.b16 %v477
  %v620 = vunpack.c.l.b16 %v478
  %v621 = vunpack.c.l.b16 %v479
  %v622 = vunpack.c.l.b16 %v480
  %v623 = vunpack.c.l.b16 %v481
  %v624 = vunpack.c.l.b16 %v482
  %v625 = vunpack.c.l.b16 %v483
  %v626 = vunpack.c.l.b16 %v484
  %v627 = vunpack.c.l.b16 %v485
  %v628 = vunpack.c.l.b16 %v486
  %v629 = vunpack.c.l.b16 %v487
  %v630 = vunpack.c.l.b16 %v488
  %v631 = vunpack.c.l.b16 %v489
  %v632 = vunpack.c.l.b16 %v490
  %v633 = vunpack.c.l.b16 %v491
  %v634 = vpack.c.b16 %v619, %v618
  %v635 = vpack.c.b16 %v621, %v620
  %v636 = vpack.c.b16 %v623, %v622
  %v637 = vpack.c.b16 %v625, %v624
  %v638 = vpack.c.b16 %v627, %v626
  %v639 = vpack.c.b16 %v629, %v628
  %v640 = vpack.c.b16 %v631, %v630
  %v641 = vpack.c.b16 %v633, %v632
  %650 = vmatpush.bf16.msra.mxu0 %v641
  %651 = vmatpush.bf16.msra.mxu0 %v640
  %652 = vmatpush.bf16.msra.mxu0 %v639
  %653 = vmatpush.bf16.msra.mxu0 %v638
  %654 = vmatpush.bf16.msra.mxu0 %v637
  %655 = vmatpush.bf16.msra.mxu0 %v636
  %656 = vmatpush.bf16.msra.mxu0 %v635
  %657 = vmatpush.bf16.msra.mxu0 %v634
  %658 = vmatmul.bf16.gmra.mxu0 %v599
  %v659 = vpop.f32.mrf.mxu0
  %v660 = vadd.f32 %v588, %v659
  %v661 = vpop.f32.mrf.mxu0
  %v662 = vadd.f32 %v590, %v661
  %663 = vmatmul.bf16.gmra.mxu0 %v521
  %v664 = vpop.f32.mrf.mxu0
  %v665 = vadd.f32 %v593, %v664
  %v666 = vpop.f32.mrf.mxu0
  %v667 = vadd.f32 %v595, %v666
  %668 = vdwg.mxu0
  %v669 = vld [vmem:[#allocation2] sm:$0xc]
  %v670 = vld [vmem:[#allocation2 + $0x10] sm:$0x3]
  %v671 = vld [vmem:[%s222] sm:$0xf]
  %v672 = vld [vmem:[%s222 + $0x4] sm:$0xf]
  %v673 = vld [vmem:[%s222 + $0x8] sm:$0xf]
  %v674 = vld [vmem:[%s222 + $0xc] sm:$0xf]
  %v675 = vld [vmem:[%s222 + $0x10] sm:$0xf]
  %v676 = vld [vmem:[%s222 + $0x14] sm:$0xf]
  %v677 = vld [vmem:[%s222 + $0x18] sm:$0xf]
  %v678 = vld [vmem:[%s222 + $0x1c] sm:$0xf]
  %v679 = vld [vmem:[%s222 + $0x20] sm:$0xf]
  %v680 = vld [vmem:[%s222 + $0x24] sm:$0xf]
  %v681 = vld [vmem:[%s222 + $0x28] sm:$0xf]
  %v682 = vld [vmem:[%s222 + $0x2c] sm:$0xf]
  %v683 = vld [vmem:[%s222 + $0x30] sm:$0xf]
  %v684 = vld [vmem:[%s222 + $0x34] sm:$0xf]
  %v685 = vld [vmem:[%s222 + $0x38] sm:$0xf]
  %v686 = vld [vmem:[%s222 + $0x3c] sm:$0xf]
  %v689 = vunpack.c.l.b16 %v669
  %v690 = vunpack.c.l.b16 %v670
  %v691 = vpack.c.b16 %v516, %v689
  %v692 = vpack.c.b16 %v690, %v690
  %v693 = vrot.slane %v691, 2
  %v694 = vrot.slane %v521, 2
  %v695 = vsel %vm245, %v693, %v694
  %v696 = vrot.slane %v692, 2
  %v697 = vsel %vm245, %v694, %v696
  %v716 = vunpack.c.l.b16 %v671
  %v717 = vunpack.c.l.b16 %v672
  %v718 = vunpack.c.l.b16 %v673
  %v719 = vunpack.c.l.b16 %v674
  %v720 = vunpack.c.l.b16 %v675
  %v721 = vunpack.c.l.b16 %v676
  %v722 = vunpack.c.l.b16 %v677
  %v723 = vunpack.c.l.b16 %v678
  %v724 = vunpack.c.l.b16 %v679
  %v725 = vunpack.c.l.b16 %v680
  %v726 = vunpack.c.l.b16 %v681
  %v727 = vunpack.c.l.b16 %v682
  %v728 = vunpack.c.l.b16 %v683
  %v729 = vunpack.c.l.b16 %v684
  %v730 = vunpack.c.l.b16 %v685
  %v731 = vunpack.c.l.b16 %v686
  %v732 = vpack.c.b16 %v717, %v716
  %v733 = vpack.c.b16 %v719, %v718
  %v734 = vpack.c.b16 %v721, %v720
  %v735 = vpack.c.b16 %v723, %v722
  %v736 = vpack.c.b16 %v725, %v724
  %v737 = vpack.c.b16 %v727, %v726
  %v738 = vpack.c.b16 %v729, %v728
  %v739 = vpack.c.b16 %v731, %v730
  %748 = vmatpush.bf16.msra.mxu0 %v739
  %749 = vmatpush.bf16.msra.mxu0 %v738
  %750 = vmatpush.bf16.msra.mxu0 %v737
  %751 = vmatpush.bf16.msra.mxu0 %v736
  %752 = vmatpush.bf16.msra.mxu0 %v735
  %753 = vmatpush.bf16.msra.mxu0 %v734
  %754 = vmatpush.bf16.msra.mxu0 %v733
  %755 = vmatpush.bf16.msra.mxu0 %v732
  %756 = vmatmul.bf16.gmra.mxu0 %v695
  %v757 = vpop.f32.mrf.mxu0
  %v758 = vadd.f32 0.0, %v757
  %v759 = vpop.f32.mrf.mxu0
  %v760 = vadd.f32 0.0, %v759
  %761 = vmatmul.bf16.gmra.mxu0 %v697
  %v762 = vpop.f32.mrf.mxu0
  %v763 = vadd.f32 0.0, %v762
  %v764 = vpop.f32.mrf.mxu0
  %v765 = vadd.f32 0.0, %v764
  %766 = vdwg.mxu0
  %v767 = vadd.f32 %v660, %v758
  %v768 = vadd.f32 %v662, %v760
  %v769 = vadd.f32 %v665, %v763
  %v770 = vadd.f32 %v667, %v765
  %v771 = vadd.f32 %v767, %v768
  %v772 = vadd.f32 %v771, %v769
  %v773 = vadd.f32 %v772, %v770
  %v774 = vrot.slane %v773, 4
  %v775 = vadd.f32 %v773, %v774
  %v776 = vrot.slane %v775, 2
  %v777 = vadd.f32 %v775, %v776
  %v778 = vrot.slane %v777, 1
  %v779 = vadd.f32 %v777, %v778
  %v780 = vmul.f32 %v767, %v767
  %v781 = vmul.f32 %v768, %v768
  %v782 = vmul.f32 %v769, %v769
  %v783 = vmul.f32 %v770, %v770
  %v784 = vadd.f32 %v780, %v781
  %v785 = vadd.f32 %v784, %v782
  %v786 = vadd.f32 %v785, %v783
  %v787 = vrot.slane %v786, 4
  %v788 = vadd.f32 %v786, %v787
  %v789 = vrot.slane %v788, 2
  %v790 = vadd.f32 %v788, %v789
  %v791 = vrot.slane %v790, 1
  %v792 = vadd.f32 %v790, %v791
  %v793 = vld [vmem:[%s2] sm:$0xff]
  %v794 = vld [vmem:[%s2 + $0x8] sm:$0xff]
  %v795 = vld [vmem:[%s2 + $0x10] sm:$0xff]
  %v796 = vld [vmem:[%s2 + $0x18] sm:$0xff]
  %v797 = vld [vmem:[%s2 + $0x20] sm:$0xff]
  %v798 = vld [vmem:[%s2 + $0x28] sm:$0xff]
  %v799 = vld [vmem:[%s2 + $0x30] sm:$0xff]
  %v800 = vld [vmem:[%s2 + $0x38] sm:$0xff]
  %v801 = vld [vmem:[%s2 + $0x40] sm:$0xff]
  %v802 = vld [vmem:[%s2 + $0x48] sm:$0xff]
  %v803 = vld [vmem:[%s2 + $0x50] sm:$0xff]
  %v804 = vld [vmem:[%s2 + $0x58] sm:$0xff]
  %v805 = vld [vmem:[%s2 + $0x60] sm:$0xff]
  %v806 = vld [vmem:[%s2 + $0x68] sm:$0xff]
  %v807 = vld [vmem:[%s2 + $0x70] sm:$0xff]
  %v808 = vld [vmem:[%s2 + $0x78] sm:$0xff]
  %809 = vmatpush.msra.mxu0 %v808
  %810 = vmatpush.msra.mxu0 %v807
  %811 = vmatpush.msra.mxu0 %v806
  %812 = vmatpush.msra.mxu0 %v805
  %813 = vmatpush.msra.mxu0 %v804
  %814 = vmatpush.msra.mxu0 %v803
  %815 = vmatpush.msra.mxu0 %v802
  %816 = vmatpush.msra.mxu0 %v801
  %817 = vmatpush.msra.mxu0 %v800
  %818 = vmatpush.msra.mxu0 %v799
  %819 = vmatpush.msra.mxu0 %v798
  %820 = vmatpush.msra.mxu0 %v797
  %821 = vmatpush.msra.mxu0 %v796
  %822 = vmatpush.msra.mxu0 %v795
  %823 = vmatpush.msra.mxu0 %v794
  %824 = vmatpush.msra.mxu0 %v793
  %825 = vmatmul.f32.gmra.mxu0 %v779
  %v826 = vpop.f32.mrf.mxu0
  %v827 = vadd.f32 0.0, %v826
  %828 = vdwg.mxu0
  %v829 = vmul.f32 %v827, 2.0
  %830 = vmatpush.msra.mxu0 %v808
  %831 = vmatpush.msra.mxu0 %v807
  %832 = vmatpush.msra.mxu0 %v806
  %833 = vmatpush.msra.mxu0 %v805
  %834 = vmatpush.msra.mxu0 %v804
  %835 = vmatpush.msra.mxu0 %v803
  %836 = vmatpush.msra.mxu0 %v802
  %837 = vmatpush.msra.mxu0 %v801
  %838 = vmatpush.msra.mxu0 %v800
  %839 = vmatpush.msra.mxu0 %v799
  %840 = vmatpush.msra.mxu0 %v798
  %841 = vmatpush.msra.mxu0 %v797
  %842 = vmatpush.msra.mxu0 %v796
  %843 = vmatpush.msra.mxu0 %v795
  %844 = vmatpush.msra.mxu0 %v794
  %845 = vmatpush.msra.mxu0 %v793
  %846 = vmatmul.f32.gmra.mxu0 %v792
  %v847 = vpop.f32.mrf.mxu0
  %v848 = vadd.f32 0.0, %v847
  %849 = vdwg.mxu0
  %v850 = vmul.f32 %v848, 4.0
  %v851 = vmul.f32 %v829, %v829
  %v852 = vsub.f32 %v850, %v851
  %v853 = vld [vmem:[%s3] sm:$0x1]
  %v854 = vadd.f32 %v852, 1e-05
  %v855 = vrsqrt.pop %v854
  %v856 = vmul.f32 %v855, %v854
  %v857 = vmul.f32 %v856, %v855
  %v858 = vmul.f32 0.5, %v857
  %v859 = vsub.f32 1.5, %v858
  %v860 = vmul.f32 %v855, %v859
  %vm861 = vweird.f32 %v854
  %vm862 = vweird.f32 %v855
  %vm863 = vmor %vm861, %vm862
  %v864 = vsel %vm863, %v855, %v860
  %v865 = vmul.f32 %v853, %v864
  %v866 = vld [vmem:[%s4] sm:$0x1]
  %v867 = vmul.f32 %v829, %v865
  %v868 = vsub.f32 %v866, %v867
  %v869 = vmul.f32 %v865, 2.0
  %v871 = vperm.slane %v869, 0
  %v873 = vmul.f32 %v767, %v871
  %v874 = vmul.f32 %v768, %v871
  %v875 = vmul.f32 %v769, %v871
  %v876 = vmul.f32 %v770, %v871
  %v878 = vperm.slane %v868, 0
  %v880 = vadd.f32 %v873, %v878
  %v881 = vadd.f32 %v874, %v878
  %v882 = vadd.f32 %v875, %v878
  %v883 = vadd.f32 %v876, %v878
  %v884 = vmax.f32 %v880, 0.0
  %v885 = vmax.f32 %v881, 0.0
  %v886 = vmax.f32 %v882, 0.0
  %v887 = vmax.f32 %v883, 0.0
  %888 = vst [vmem:[%s5] sm:$0xff] %v884
  %889 = vst [vmem:[%s5 + $0x8] sm:$0xff] %v885
  %890 = vst [vmem:[%s5 + $0x10] sm:$0xff] %v886
  %891 = vst [vmem:[%s5 + $0x18] sm:$0xff] %v887
  // Predicated region
  $region22: #{recurrent_block_forward.1} parent=0 // pred_check
    _
  $region23: #{recurrent_block_forward.1} parent=0 // pred_check_branch
    %893 = sbr.rel (0) target = $region25
  $region24: #{recurrent_block_forward.1} parent=0 // pred_region
    _
  $region25: #{recurrent_block_forward.1} parent=0 // pred_fallthru
    _
  // Predicated region
  $region26: #{recurrent_block_forward.1} parent=0 // pred_check
    _
  $region27: #{recurrent_block_forward.1} parent=0 // pred_check_branch
    %895 = sbr.rel (0) target = $region29
  $region28: #{recurrent_block_forward.1} parent=0 // pred_region
    _
  $region29: #{recurrent_block_forward.1} parent=0 // pred_fallthru
    _

</llo_original>
